<compile_context>
chip_gen: v6e
topology: v6e:2x2x1
jax: 0.10.0
libtpu: 0.0.40
codegen_flags: <defaults>
</compile_context>

<pallas_src>
import numpy as np
import jax
import jax.numpy as jnp
from jax import lax
from jax.experimental import pallas as pl
from jax.experimental.pallas import tpu as pltpu

BN_EPS = 1e-5


def _round_up(x, m):
    return ((x + m - 1) // m) * m


# --------------------------------------------------------------------------- #
# Kernel
# --------------------------------------------------------------------------- #
def wdn_kernel(
    idx_ref,   # (TB, F)    int32 indices (offsets already added)
    fc_ref,    # (1, Vp)    wide table row; (wide_bias + b3)/F folded into real entries
    t1_ref,    # (Vp, H1p)  embedding @ Linear1(+BN1) folded table (resident in VMEM)
    b1_ref,    # (1, H1p)
    w2_ref,    # (H1p, H2p) Linear2 with BN2 folded in
    b2_ref,    # (1, H2p)
    w3_ref,    # (1, H2p)   output Linear weight as a lane row
    out_ref,   # (1, TB)    lane-dense output row
):
    TB, F = idx_ref.shape
    Vp = t1_ref.shape[0]
    mm_dtype = t1_ref.dtype          # f32, or bf16 on the v6e/v7x fast-MXU path

    idx = idx_ref[...]                                            # (TB, F)
    lane_iota = lax.broadcasted_iota(jnp.int32, (TB, Vp), 1)      # (TB, Vp)

    # Multi-hot row mask: per-field id ranges are disjoint, so summing the F
    # one-hot compares gives an exact 0/1 mask with F ones per (valid) row.
    # F VPU compares + adds — no per-field matmuls.
    mh = (lane_iota == idx[:, 0:1]).astype(jnp.float32)
    for f in range(1, F):                                         # static unroll, F small
        mh = mh + (lane_iota == idx[:, f:f + 1]).astype(jnp.float32)

    dn = (((1,), (1,)), ((), ()))    # contract last dim of both operands

    # Wide part, directly lane-dense: (1, Vp) x (TB, Vp) -> (1, TB).
    # Bias is pre-folded into fc_ref, so no extra scalar input is needed.
    wide_row = lax.dot_general(fc_ref[...], mh, dn,
                               preferred_element_type=jnp.float32)          # (1, TB)

    # Deep part: Linear1(+BN1) is pre-folded into the embedding table, so the
    # whole F-field gather+project is ONE dense matmul on the MXU.
    h = jnp.dot(mh.astype(mm_dtype), t1_ref[...],
                preferred_element_type=jnp.float32)                         # (TB, H1p)
    h = jnp.maximum(h + b1_ref[...], 0.0)                                   # ReLU (Dropout = id, eval)
    h = jnp.dot(h.astype(mm_dtype), w2_ref[...],
                preferred_element_type=jnp.float32) + b2_ref[...]
    h = jnp.maximum(h, 0.0)

    # Output Linear (N=1), lane-dense: (1, H2p) x (TB, H2p) -> (1, TB).
    deep_row = lax.dot_general(w3_ref[...], h, dn,
                               preferred_element_type=jnp.float32)          # (1, TB)

    out_ref[...] = wide_row + deep_row


# --------------------------------------------------------------------------- #
# One-time parameter preparation (do once at model load and cache the result)
# --------------------------------------------------------------------------- #
def prepare_params(params, field_dims, *, use_bf16=False):
    """Fold BN into the Linears, fold Linear1 into the embedding table, pad to
    lane-dense shapes.  All padding is exact zeros -> results unchanged."""
    field_dims = np.asarray(field_dims, dtype=np.int64)
    V, D = params["embed_table"].shape
    FD, H1 = params["w1"].shape
    H2 = params["w2"].shape[1]
    F = len(field_dims)
    assert FD == F * D

    Vp = _round_up(V, 128)
    H1p = _round_up(H1, 128)
    H2p = _round_up(H2, 128)

    # Fold eval-mode BatchNorm into the Linear layers.
    s1 = params["g1"] * lax.rsqrt(params["v1"] + BN_EPS)                 # (1, H1)
    w1f = params["w1"] * s1                                              # (FD, H1)
    b1f = (params["b1"] - params["m1"]) * s1 + params["be1"]             # (1, H1)
    s2 = params["g2"] * lax.rsqrt(params["v2"] + BN_EPS)
    w2f = params["w2"] * s2
    b2f = (params["b2"] - params["m2"]) * s2 + params["be2"]

    # Fold Linear1 (+BN1) into the embedding table:
    #   t1[v] = embed_table[v] @ w1f[field(v)*D:(field(v)+1)*D]
    t1 = jnp.zeros((Vp, H1p), jnp.float32)
    start = 0
    for f, fd in enumerate(field_dims.tolist()):
        fd = int(fd)
        rows = params["embed_table"][start:start + fd]                   # (fd, D)
        t1 = t1.at[start:start + fd, :H1].set(rows @ w1f[f * D:(f + 1) * D, :])
        start += fd

    # Wide table as a lane row; fold (wide_bias + b3)/F into every real entry
    # (each row sums exactly F real entries, so the sum gains exactly the bias).
    bias = (params["wide_bias"] + params["b3"]).reshape(())
    fc_row = jnp.zeros((1, Vp), jnp.float32).at[0, :V].set(
        params["fc_table"][:, 0] + bias / F)

    b1p = jnp.zeros((1, H1p), jnp.float32).at[:, :H1].set(b1f)
    w2p = jnp.zeros((H1p, H2p), jnp.float32).at[:H1, :H2].set(w2f)
    b2p = jnp.zeros((1, H2p), jnp.float32).at[:, :H2].set(b2f)
    w3_row = jnp.zeros((1, H2p), jnp.float32).at[0, :H2].set(params["w3"][:, 0])

    mm_dtype = jnp.bfloat16 if use_bf16 else jnp.float32   # bf16 MXU path for v6e/v7x
    return {
        "offsets": params["offsets"].astype(jnp.int32),
        "fc_row": fc_row,
        "t1": t1.astype(mm_dtype),
        "b1": b1p,
        "w2": w2p.astype(mm_dtype),
        "b2": b2p,
        "w3_row": w3_row,
        "num_fields": F,
    }


# --------------------------------------------------------------------------- #
# Forward wrapper
# --------------------------------------------------------------------------- #
def wide_and_deep_forward(x_idx, prep, *, tile_b=None):
    """x_idx: (B, F) int32 per-field categorical indices. Returns (B,) float32."""
    B, F = x_idx.shape
    assert F == prep["num_fields"]
    Vp, H1p = prep["t1"].shape
    H2p = prep["w2"].shape[1]

    # tile_b: multiple of 128 (lane-dense output blocks), capped at 512 so big
    # batches pipeline HBM<->VMEM and keep >= 2 'parallel' grid steps for v7x's
    # two TensorCores.  Batch is padded up instead of shrinking the tile.
    if tile_b is None:
        tile_b = min(512, _round_up(max((B + 1) // 2, 1), 128))
    assert tile_b % 128 == 0
    B_pad = _round_up(B, tile_b)

    idx = (x_idx.astype(jnp.int32) + prep["offsets"][None, :]).astype(jnp.int32)
    if B_pad != B:
        # Pad rows with id 0 (a valid row); padded outputs are sliced off below.
        idx = jnp.pad(idx, ((0, B_pad - B), (0, 0)))

    # VMEM budget: double-buffered resident tables + batch tiles + live temps.
    msz = prep["t1"].dtype.itemsize
    const_bytes = Vp * H1p * msz + H1p * H2p * msz + (Vp + H1p + 2 * H2p) * 4
    tile_bytes = tile_b * (F * 4 + 4)
    live_bytes = tile_b * (2 * Vp + H1p + 2 * H2p) * 4
    vmem_limit = int(min(112 << 20,
                         max(32 << 20,
                             2 * const_bytes + 2 * tile_bytes + live_bytes + (4 << 20))))

    batch_spec = pl.BlockSpec((tile_b, F), lambda i: (i, 0))
    const_spec = lambda shape: pl.BlockSpec(shape, lambda i: (0, 0))   # resident, fetched once

    out = pl.pallas_call(
        wdn_kernel,
        out_shape=jax.ShapeDtypeStruct((1, B_pad), jnp.float32),
        grid_spec=pltpu.PrefetchScalarGridSpec(
            num_scalar_prefetch=0,
            grid=(B_pad // tile_b,),
            in_specs=[
                batch_spec,                    # idx
                const_spec((1, Vp)),           # fc row (bias folded)
                const_spec((Vp, H1p)),         # embedding @ Linear1 folded table
                const_spec((1, H1p)),          # b1
                const_spec((H1p, H2p)),        # w2 (BN folded)
                const_spec((1, H2p)),          # b2
                const_spec((1, H2p)),          # w3 row
            ],
            out_specs=pl.BlockSpec((1, tile_b), lambda i: (0, i)),      # lane-dense
        ),
        compiler_params=pltpu.CompilerParams(
            dimension_semantics=("parallel",),
            vmem_limit_bytes=vmem_limit),
    )(idx, prep["fc_row"], prep["t1"], prep["b1"], prep["w2"], prep["b2"], prep["w3_row"])
    return out[0, :B]


# --------------------------------------------------------------------------- #
# Pure-JAX reference (mirrors the PyTorch module, eval mode) + param factory
# --------------------------------------------------------------------------- #
def reference_forward(x_idx, params):
    idx = x_idx + params["offsets"][None, :]
    emb = jnp.take(params["embed_table"], idx, axis=0)
    lin = jnp.take(params["fc_table"], idx, axis=0)[..., 0]
    B, F, D = emb.shape
    wide = jnp.sum(lin, axis=1, keepdims=True) + params["wide_bias"]
    h = emb.reshape(B, F * D)
    h = h @ params["w1"] + params["b1"]
    h = (h - params["m1"]) / jnp.sqrt(params["v1"] + BN_EPS) * params["g1"] + params["be1"]
    h = jnp.maximum(h, 0.0)
    h = h @ params["w2"] + params["b2"]
    h = (h - params["m2"]) / jnp.sqrt(params["v2"] + BN_EPS) * params["g2"] + params["be2"]
    h = jnp.maximum(h, 0.0)
    deep = h @ params["w3"] + params["b3"]
    return (wide + deep)[:, 0]


def make_params(key, field_dims, embed_dim, mlp_dims):
    total = int(np.sum(field_dims))
    F = len(field_dims)
    FD = F * embed_dim
    H1, H2 = mlp_dims
    offsets = np.array((0, *np.cumsum(field_dims)[:-1]), dtype=np.int32)

    ks = jax.random.split(key, 8)

    def xavier(k, shape):
        fan_in, fan_out = shape[0], shape[1]
        bound = float(np.sqrt(6.0 / (fan_in + fan_out)))
        return jax.random.uniform(k, shape, jnp.float32, -bound, bound)

    return {
        "offsets": jnp.asarray(offsets, jnp.int32),
        "embed_table": xavier(ks[0], (total, embed_dim)),
        "fc_table": xavier(ks[1], (total, 1)),
        "wide_bias": jnp.zeros((1, 1), jnp.float32),
        "w1": xavier(ks[2], (FD, H1)),
        "b1": jax.random.normal(ks[3], (1, H1), jnp.float32) * 0.01,
        "g1": jnp.ones((1, H1), jnp.float32),
        "be1": jnp.zeros((1, H1), jnp.float32),
        "m1": jnp.zeros((1, H1), jnp.float32),
        "v1": jnp.ones((1, H1), jnp.float32),
        "w2": xavier(ks[4], (H1, H2)),
        "b2": jax.random.normal(ks[5], (1, H2), jnp.float32) * 0.01,
        "g2": jnp.ones((1, H2), jnp.float32),
        "be2": jnp.zeros((1, H2), jnp.float32),
        "m2": jnp.zeros((1, H2), jnp.float32),
        "v2": jnp.ones((1, H2), jnp.float32),
        "w3": xavier(ks[6], (H2, 1)),
        "b3": jax.random.normal(ks[7], (1, 1), jnp.float32) * 0.01,
    }


if __name__ == "__main__":
    # small, deterministic config
    field_dims = np.array([10, 20, 30, 40], dtype=np.int64)   # F = 4 fields, 100 total ids
    embed_dim = 16                                            # args.embed_dim
    mlp_dims = (32, 32)                                       # args.mlp_dims
    B = 8                                                     # batch

    key = jax.random.PRNGKey(0)
    kp, kx = jax.random.split(key)
    params = make_params(kp, field_dims, embed_dim, mlp_dims)

    # per-field categorical indices, each within its own field cardinality
    cols = []
    for f, fd in enumerate(field_dims):
        kx, kf = jax.random.split(kx)
        cols.append(jax.random.randint(kf, (B, 1), 0, int(fd), dtype=jnp.int32))
    x_idx = jnp.concatenate(cols, axis=1)                     # (B, F) int32

    ref = jax.block_until_ready(reference_forward(x_idx, params))

    # One-time parameter prep (would be cached at model load in production).
    prep = prepare_params(params, field_dims, use_bf16=False)
    out = jax.block_until_ready(wide_and_deep_forward(x_idx, prep))
    assert out.shape == (B,)
    np.testing.assert_allclose(np.asarray(out), np.asarray(ref), rtol=5e-4, atol=1e-4)

    # bf16 MXU-operand path (recommended on v6e/v7x): same kernel, bf16 tables.
    prep_bf16 = prepare_params(params, field_dims, use_bf16=True)
    out_bf16 = jax.block_until_ready(wide_and_deep_forward(x_idx, prep_bf16))
    np.testing.assert_allclose(np.asarray(out_bf16), np.asarray(ref), rtol=5e-2, atol=1e-1)

    print("KERNEL_OK")
</pallas_src>

<mosaic_0001>
module attributes {stable_mosaic.version = 11 : i64} {
  func.func @wdn_kernel(%arg0: i32, %arg1: memref<128x4xi32, #tpu.memory_space<vmem>>, %arg2: memref<1x128xf32, #tpu.memory_space<vmem>>, %arg3: memref<128x128xf32, #tpu.memory_space<vmem>>, %arg4: memref<1x128xf32, #tpu.memory_space<vmem>>, %arg5: memref<128x128xf32, #tpu.memory_space<vmem>>, %arg6: memref<1x128xf32, #tpu.memory_space<vmem>>, %arg7: memref<1x128xf32, #tpu.memory_space<vmem>>, %arg8: memref<1x128xf32, #tpu.memory_space<vmem>>) attributes {dimension_semantics = [#tpu.dimension_semantics<parallel>], iteration_bounds = array<i64: 1>, scalar_prefetch = 0 : i64, scratch_operands = 0 : i64, tpu.core_type = #tpu.core_type<tc>, window_params = [{transform_indices = @transform_0, window_bounds = array<i64: 128, 4>}, {pipeline_mode = #tpu.pipeline_mode<synchronous>, transform_indices = @transform_1, window_bounds = array<i64: 1, 128>}, {pipeline_mode = #tpu.pipeline_mode<synchronous>, transform_indices = @transform_2, window_bounds = array<i64: 128, 128>}, {pipeline_mode = #tpu.pipeline_mode<synchronous>, transform_indices = @transform_3, window_bounds = array<i64: 1, 128>}, {pipeline_mode = #tpu.pipeline_mode<synchronous>, transform_indices = @transform_4, window_bounds = array<i64: 128, 128>}, {pipeline_mode = #tpu.pipeline_mode<synchronous>, transform_indices = @transform_5, window_bounds = array<i64: 1, 128>}, {pipeline_mode = #tpu.pipeline_mode<synchronous>, transform_indices = @transform_6, window_bounds = array<i64: 1, 128>}, {transform_indices = @transform_7, window_bounds = array<i64: 1, 128>}]} {
    %c0 = arith.constant 0 : index
    %c0_0 = arith.constant 0 : index
    %0 = vector.load %arg1[%c0, %c0_0] : memref<128x4xi32, #tpu.memory_space<vmem>>, vector<128x4xi32>
    %1 = tpu.iota {dimensions = array<i32: 1>} : vector<128x128xi32>
    %2 = vector.extract_strided_slice %0 {offsets = [0, 0], sizes = [128, 1], strides = [1, 1]} : vector<128x4xi32> to vector<128x1xi32>
    %3 = vector.broadcast %2 : vector<128x1xi32> to vector<128x128xi32>
    %4 = arith.cmpi eq, %1, %3 : vector<128x128xi32>
    %5 = arith.extui %4 : vector<128x128xi1> to vector<128x128xi32>
    %6 = arith.sitofp %5 : vector<128x128xi32> to vector<128x128xf32>
    %7 = vector.extract_strided_slice %0 {offsets = [0, 1], sizes = [128, 1], strides = [1, 1]} : vector<128x4xi32> to vector<128x1xi32>
    %8 = vector.broadcast %7 : vector<128x1xi32> to vector<128x128xi32>
    %9 = arith.cmpi eq, %1, %8 : vector<128x128xi32>
    %10 = arith.extui %9 : vector<128x128xi1> to vector<128x128xi32>
    %11 = arith.sitofp %10 : vector<128x128xi32> to vector<128x128xf32>
    %12 = arith.addf %6, %11 : vector<128x128xf32>
    %13 = vector.extract_strided_slice %0 {offsets = [0, 2], sizes = [128, 1], strides = [1, 1]} : vector<128x4xi32> to vector<128x1xi32>
    %14 = vector.broadcast %13 : vector<128x1xi32> to vector<128x128xi32>
    %15 = arith.cmpi eq, %1, %14 : vector<128x128xi32>
    %16 = arith.extui %15 : vector<128x128xi1> to vector<128x128xi32>
    %17 = arith.sitofp %16 : vector<128x128xi32> to vector<128x128xf32>
    %18 = arith.addf %12, %17 : vector<128x128xf32>
    %19 = vector.extract_strided_slice %0 {offsets = [0, 3], sizes = [128, 1], strides = [1, 1]} : vector<128x4xi32> to vector<128x1xi32>
    %20 = vector.broadcast %19 : vector<128x1xi32> to vector<128x128xi32>
    %21 = arith.cmpi eq, %1, %20 : vector<128x128xi32>
    %22 = arith.extui %21 : vector<128x128xi1> to vector<128x128xi32>
    %23 = arith.sitofp %22 : vector<128x128xi32> to vector<128x128xf32>
    %24 = arith.addf %18, %23 : vector<128x128xf32>
    %c0_1 = arith.constant 0 : index
    %c0_2 = arith.constant 0 : index
    %25 = vector.load %arg2[%c0_1, %c0_2] : memref<1x128xf32, #tpu.memory_space<vmem>>, vector<1x128xf32>
    %cst = arith.constant dense<0.000000e+00> : vector<1x128xf32>
    %26 = tpu.matmul %25, %24, %cst {dimension_numbers = #tpu.dot_dimension_numbers<[1], [1], [0], [0], [0, 0, 1, 0], [], []>} : vector<1x128xf32>, vector<128x128xf32>, vector<1x128xf32> -> vector<1x128xf32>
    %c0_3 = arith.constant 0 : index
    %c0_4 = arith.constant 0 : index
    %27 = vector.load %arg3[%c0_3, %c0_4] : memref<128x128xf32, #tpu.memory_space<vmem>>, vector<128x128xf32>
    %cst_5 = arith.constant dense<0.000000e+00> : vector<128x128xf32>
    %28 = tpu.matmul %24, %27, %cst_5 {dimension_numbers = #tpu.dot_dimension_numbers<[1], [0], [0], [1], [0, 0, 1, 1], [], []>} : vector<128x128xf32>, vector<128x128xf32>, vector<128x128xf32> -> vector<128x128xf32>
    %c0_6 = arith.constant 0 : index
    %c0_7 = arith.constant 0 : index
    %29 = vector.load %arg4[%c0_6, %c0_7] : memref<1x128xf32, #tpu.memory_space<vmem>>, vector<1x128xf32>
    %30 = vector.broadcast %29 : vector<1x128xf32> to vector<128x128xf32>
    %31 = arith.addf %28, %30 : vector<128x128xf32>
    %cst_8 = arith.constant 0.000000e+00 : f32
    %32 = vector.broadcast %cst_8 : f32 to vector<128x128xf32>
    %33 = arith.maximumf %31, %32 : vector<128x128xf32>
    %c0_9 = arith.constant 0 : index
    %c0_10 = arith.constant 0 : index
    %34 = vector.load %arg5[%c0_9, %c0_10] : memref<128x128xf32, #tpu.memory_space<vmem>>, vector<128x128xf32>
    %cst_11 = arith.constant dense<0.000000e+00> : vector<128x128xf32>
    %35 = tpu.matmul %33, %34, %cst_11 {dimension_numbers = #tpu.dot_dimension_numbers<[1], [0], [0], [1], [0, 0, 1, 1], [], []>} : vector<128x128xf32>, vector<128x128xf32>, vector<128x128xf32> -> vector<128x128xf32>
    %c0_12 = arith.constant 0 : index
    %c0_13 = arith.constant 0 : index
    %36 = vector.load %arg6[%c0_12, %c0_13] : memref<1x128xf32, #tpu.memory_space<vmem>>, vector<1x128xf32>
    %37 = vector.broadcast %36 : vector<1x128xf32> to vector<128x128xf32>
    %38 = arith.addf %35, %37 : vector<128x128xf32>
    %cst_14 = arith.constant 0.000000e+00 : f32
    %39 = vector.broadcast %cst_14 : f32 to vector<128x128xf32>
    %40 = arith.maximumf %38, %39 : vector<128x128xf32>
    %c0_15 = arith.constant 0 : index
    %c0_16 = arith.constant 0 : index
    %41 = vector.load %arg7[%c0_15, %c0_16] : memref<1x128xf32, #tpu.memory_space<vmem>>, vector<1x128xf32>
    %cst_17 = arith.constant dense<0.000000e+00> : vector<1x128xf32>
    %42 = tpu.matmul %41, %40, %cst_17 {dimension_numbers = #tpu.dot_dimension_numbers<[1], [1], [0], [0], [0, 0, 1, 0], [], []>} : vector<1x128xf32>, vector<128x128xf32>, vector<1x128xf32> -> vector<1x128xf32>
    %43 = arith.addf %26, %42 : vector<1x128xf32>
    %c0_18 = arith.constant 0 : index
    %c0_19 = arith.constant 0 : index
    %44 = vector.load %arg8[%c0_18, %c0_19] : memref<1x128xf32, #tpu.memory_space<vmem>>, vector<1x128xf32>
    tpu.vector_store %arg8[%c0_18, %c0_19], %43 {strides = array<i32>} : memref<1x128xf32, #tpu.memory_space<vmem>>, vector<1x128xf32>,
    return
  }
  func.func @transform_0(%arg0: i32) -> (i32, i32) {
    %c0_i32 = arith.constant 0 : i32
    %c0_i32_0 = arith.constant 0 : i32
    return %arg0, %c0_i32 : i32, i32
  }
  func.func @transform_1(%arg0: i32) -> (i32, i32) {
    %c0_i32 = arith.constant 0 : i32
    %c0_i32_0 = arith.constant 0 : i32
    %c0_i32_1 = arith.constant 0 : i32
    return %c0_i32, %c0_i32_0 : i32, i32
  }
  func.func @transform_2(%arg0: i32) -> (i32, i32) {
    %c0_i32 = arith.constant 0 : i32
    %c0_i32_0 = arith.constant 0 : i32
    %c0_i32_1 = arith.constant 0 : i32
    return %c0_i32, %c0_i32_0 : i32, i32
  }
  func.func @transform_3(%arg0: i32) -> (i32, i32) {
    %c0_i32 = arith.constant 0 : i32
    %c0_i32_0 = arith.constant 0 : i32
    %c0_i32_1 = arith.constant 0 : i32
    return %c0_i32, %c0_i32_0 : i32, i32
  }
  func.func @transform_4(%arg0: i32) -> (i32, i32) {
    %c0_i32 = arith.constant 0 : i32
    %c0_i32_0 = arith.constant 0 : i32
    %c0_i32_1 = arith.constant 0 : i32
    return %c0_i32, %c0_i32_0 : i32, i32
  }
  func.func @transform_5(%arg0: i32) -> (i32, i32) {
    %c0_i32 = arith.constant 0 : i32
    %c0_i32_0 = arith.constant 0 : i32
    %c0_i32_1 = arith.constant 0 : i32
    return %c0_i32, %c0_i32_0 : i32, i32
  }
  func.func @transform_6(%arg0: i32) -> (i32, i32) {
    %c0_i32 = arith.constant 0 : i32
    %c0_i32_0 = arith.constant 0 : i32
    %c0_i32_1 = arith.constant 0 : i32
    return %c0_i32, %c0_i32_0 : i32, i32
  }
  func.func @transform_7(%arg0: i32) -> (i32, i32) {
    %c0_i32 = arith.constant 0 : i32
    %c0_i32_0 = arith.constant 0 : i32
    return %c0_i32, %arg0 : i32, i32
  }
}

</mosaic_0001>

<llo_original>
// kernel: tpu_custom_call.1
$region0: #{tpu_custom_call.1}
  #allocation0 [shape = 'u32[]', space=smem, size = 0x4, offset = 0x4, fixed_abs, tag = 'smem constant byte address 0x4 - core index']
  #allocation1 [shape = 'u32[144,128]{1,0:T(1,128)}', space=vmem, size = 0x12000, scoped, tag = 'internal scratch']
  %s0 = inlined_call_operand.vmem [shape: s32[128,4], index: 0, kind: input, shape index: {}]
  %s1 = inlined_call_operand.vmem [shape: f32[1,128], index: 1, kind: input, shape index: {}]
  %s2 = inlined_call_operand.vmem [shape: f32[128,128], index: 2, kind: input, shape index: {}]
  %s3 = inlined_call_operand.vmem [shape: f32[1,128], index: 3, kind: input, shape index: {}]
  %s4 = inlined_call_operand.hbm [shape: f32[128,128], index: 4, kind: input, shape index: {}]
  %s5 = inlined_call_operand.vmem [shape: f32[1,128], index: 5, kind: input, shape index: {}]
  %s6 = inlined_call_operand.vmem [shape: f32[1,128], index: 6, kind: input, shape index: {}]
  %s7 = inlined_call_operand.hbm [shape: f32[1,128], index: 7, kind: output, shape index: {}]
  %s8 = sld [smem:[#allocation0]]
  $region42: #{tpu_custom_call.1} parent=0
    _
  %s10 = ssub.s32 1, %s8
  %s11 = scalar_select 0, %s10, %s8
  $region1: #{tpu_custom_call.1} parent=0
    #allocation2 [shape = 'u8[65536]{0}', space=vmem, size = 0x10000, scoped, tag = 'input window, operand 4, single buffered']
    #allocation3 [shape = 's32[1]{0}', space=sflag, size = 0x4, scoped, tag = 'scoped memory for tpu_custom_call.1']
    #allocation4 [shape = 's32[1]{0}', space=sflag, size = 0x4, scoped, tag = 'scoped memory for tpu_custom_call.1']
    #allocation5 [shape = 'u8[512]{0}', space=vmem, size = 0x400, scoped, tag = 'output window, operand 0, single buffered']
    %12 = vsyncpa [#allocation3], 0
    %13 = vsyncpa [#allocation4], 0
    // Predicated region
    $region2: #{tpu_custom_call.1} parent=1 // pred_check
      _
    $region3: #{tpu_custom_call.1} parent=1 // pred_check_branch
      %15 = sbr.rel (0) target = $region5
    $region4: #{tpu_custom_call.1} parent=1 // pred_region
      _
    $region5: #{tpu_custom_call.1} parent=1 // pred_fallthru
      _
    // Predicated region
    $region6: #{tpu_custom_call.1} parent=1 // pred_check
      _
    $region7: #{tpu_custom_call.1} parent=1 // pred_check_branch
      %17 = sbr.rel (0) target = $region9
    $region8: #{tpu_custom_call.1} parent=1 // pred_region
      _
    $region9: #{tpu_custom_call.1} parent=1 // pred_fallthru
      _
    // Predicated region
    $region10: #{tpu_custom_call.1} parent=1 // pred_check
      _
    $region11: #{tpu_custom_call.1} parent=1 // pred_check_branch
      %19 = sbr.rel (0) target = $region13
    $region12: #{tpu_custom_call.1} parent=1 // pred_region
      _
    $region13: #{tpu_custom_call.1} parent=1 // pred_fallthru
      _
    // Predicated region
    $region14: #{tpu_custom_call.1} parent=1 // pred_check
      _
    $region15: #{tpu_custom_call.1} parent=1 // pred_check_branch
      %21 = sbr.rel (0) target = $region17
    $region16: #{tpu_custom_call.1} parent=1 // pred_region
      _
    $region17: #{tpu_custom_call.1} parent=1 // pred_fallthru
      _
    // Predicated region
    $region18: #{tpu_custom_call.1} parent=1 // pred_check
      _
    $region19: #{tpu_custom_call.1} parent=1 // pred_check_branch
      %23 = sbr.rel (0) target = $region21
    $region20: #{tpu_custom_call.1} parent=1 // pred_region
      %s25 = ssub.s32 2048, 2048
      %26 = vsyncadd [#allocation3], %s25
      %s27 = sshll.u32 [#allocation2], 4
      %s28 = int_to_ptr.vmem [resolvable:$true] %s27
      %33 = dma.hbm_to_vmem [thread:$0]  %s4, 2048, %s28, [#allocation3], 128, 128, 8
    $region21: #{tpu_custom_call.1} parent=1 // pred_fallthru
      _
    // Predicated region
    $region22: #{tpu_custom_call.1} parent=1 // pred_check
      _
    $region23: #{tpu_custom_call.1} parent=1 // pred_check_branch
      %35 = sbr.rel (0) target = $region25
    $region24: #{tpu_custom_call.1} parent=1 // pred_region
      _
    $region25: #{tpu_custom_call.1} parent=1 // pred_fallthru
      _
    // Predicated region
    $region26: #{tpu_custom_call.1} parent=1 // pred_check
      _
    $region27: #{tpu_custom_call.1} parent=1 // pred_check_branch
      %37 = sbr.rel (0) target = $region29
    $region28: #{tpu_custom_call.1} parent=1 // pred_region
      _
    $region29: #{tpu_custom_call.1} parent=1 // pred_fallthru
      _
    // Predicated region
    $region30: #{tpu_custom_call.1} parent=1 // pred_check
      _
    $region31: #{tpu_custom_call.1} parent=1 // pred_check_branch
      %39 = sbr.rel (0) target = $region33
    $region32: #{tpu_custom_call.1} parent=1 // pred_region
      %40 = dma.done [#allocation3], 2048
    $region33: #{tpu_custom_call.1} parent=1 // pred_fallthru
      _
    %v41 = vld [vmem:[%s0] sm:$0xff]
    %v42 = vld [vmem:[%s0 + $0x8] sm:$0xff]
    %v43 = vld [vmem:[%s0 + $0x10] sm:$0xff]
    %v44 = vld [vmem:[%s0 + $0x18] sm:$0xff]
    %v45 = vld [vmem:[%s0 + $0x20] sm:$0xff]
    %v46 = vld [vmem:[%s0 + $0x28] sm:$0xff]
    %v47 = vld [vmem:[%s0 + $0x30] sm:$0xff]
    %v48 = vld [vmem:[%s0 + $0x38] sm:$0xff]
    %v49 = vld [vmem:[%s0 + $0x40] sm:$0xff]
    %v50 = vld [vmem:[%s0 + $0x48] sm:$0xff]
    %v51 = vld [vmem:[%s0 + $0x50] sm:$0xff]
    %v52 = vld [vmem:[%s0 + $0x58] sm:$0xff]
    %v53 = vld [vmem:[%s0 + $0x60] sm:$0xff]
    %v54 = vld [vmem:[%s0 + $0x68] sm:$0xff]
    %v55 = vld [vmem:[%s0 + $0x70] sm:$0xff]
    %v56 = vld [vmem:[%s0 + $0x78] sm:$0xff]
    %v57 = vlaneseq
    %v58 = vand.u32 %v57, 127
    %59 = vset.pattern.permute.xlu0 0
    %60 = vperm.xlu0 %59, %v41
    %v61 = vpop.permute.xlu0 %60
    %62 = vset.pattern.permute.xlu0 0
    %63 = vperm.xlu0 %62, %v42
    %v64 = vpop.permute.xlu0 %63
    %65 = vset.pattern.permute.xlu0 0
    %66 = vperm.xlu0 %65, %v43
    %v67 = vpop.permute.xlu0 %66
    %68 = vset.pattern.permute.xlu0 0
    %69 = vperm.xlu0 %68, %v44
    %v70 = vpop.permute.xlu0 %69
    %71 = vset.pattern.permute.xlu0 0
    %72 = vperm.xlu0 %71, %v45
    %v73 = vpop.permute.xlu0 %72
    %74 = vset.pattern.permute.xlu0 0
    %75 = vperm.xlu0 %74, %v46
    %v76 = vpop.permute.xlu0 %75
    %77 = vset.pattern.permute.xlu0 0
    %78 = vperm.xlu0 %77, %v47
    %v79 = vpop.permute.xlu0 %78
    %80 = vset.pattern.permute.xlu0 0
    %81 = vperm.xlu0 %80, %v48
    %v82 = vpop.permute.xlu0 %81
    %83 = vset.pattern.permute.xlu0 0
    %84 = vperm.xlu0 %83, %v49
    %v85 = vpop.permute.xlu0 %84
    %86 = vset.pattern.permute.xlu0 0
    %87 = vperm.xlu0 %86, %v50
    %v88 = vpop.permute.xlu0 %87
    %89 = vset.pattern.permute.xlu0 0
    %90 = vperm.xlu0 %89, %v51
    %v91 = vpop.permute.xlu0 %90
    %92 = vset.pattern.permute.xlu0 0
    %93 = vperm.xlu0 %92, %v52
    %v94 = vpop.permute.xlu0 %93
    %95 = vset.pattern.permute.xlu0 0
    %96 = vperm.xlu0 %95, %v53
    %v97 = vpop.permute.xlu0 %96
    %98 = vset.pattern.permute.xlu0 0
    %99 = vperm.xlu0 %98, %v54
    %v100 = vpop.permute.xlu0 %99
    %101 = vset.pattern.permute.xlu0 0
    %102 = vperm.xlu0 %101, %v55
    %v103 = vpop.permute.xlu0 %102
    %104 = vset.pattern.permute.xlu0 0
    %105 = vperm.xlu0 %104, %v56
    %v106 = vpop.permute.xlu0 %105
    %vm107 = vcmp.eq.s32.totalorder %v58, %v61
    %vm108 = vcmp.eq.s32.totalorder %v58, %v64
    %vm109 = vcmp.eq.s32.totalorder %v58, %v67
    %vm110 = vcmp.eq.s32.totalorder %v58, %v70
    %vm111 = vcmp.eq.s32.totalorder %v58, %v73
    %vm112 = vcmp.eq.s32.totalorder %v58, %v76
    %vm113 = vcmp.eq.s32.totalorder %v58, %v79
    %vm114 = vcmp.eq.s32.totalorder %v58, %v82
    %vm115 = vcmp.eq.s32.totalorder %v58, %v85
    %vm116 = vcmp.eq.s32.totalorder %v58, %v88
    %vm117 = vcmp.eq.s32.totalorder %v58, %v91
    %vm118 = vcmp.eq.s32.totalorder %v58, %v94
    %vm119 = vcmp.eq.s32.totalorder %v58, %v97
    %vm120 = vcmp.eq.s32.totalorder %v58, %v100
    %vm121 = vcmp.eq.s32.totalorder %v58, %v103
    %vm122 = vcmp.eq.s32.totalorder %v58, %v106
    %v123 = vsel %vm107, 1, 0
    %v124 = vsel %vm108, 1, 0
    %v125 = vsel %vm109, 1, 0
    %v126 = vsel %vm110, 1, 0
    %v127 = vsel %vm111, 1, 0
    %v128 = vsel %vm112, 1, 0
    %v129 = vsel %vm113, 1, 0
    %v130 = vsel %vm114, 1, 0
    %v131 = vsel %vm115, 1, 0
    %v132 = vsel %vm116, 1, 0
    %v133 = vsel %vm117, 1, 0
    %v134 = vsel %vm118, 1, 0
    %v135 = vsel %vm119, 1, 0
    %v136 = vsel %vm120, 1, 0
    %v137 = vsel %vm121, 1, 0
    %v138 = vsel %vm122, 1, 0
    %v139 = vcvt.s32.f32 %v123
    %v140 = vcvt.s32.f32 %v124
    %v141 = vcvt.s32.f32 %v125
    %v142 = vcvt.s32.f32 %v126
    %v143 = vcvt.s32.f32 %v127
    %v144 = vcvt.s32.f32 %v128
    %v145 = vcvt.s32.f32 %v129
    %v146 = vcvt.s32.f32 %v130
    %v147 = vcvt.s32.f32 %v131
    %v148 = vcvt.s32.f32 %v132
    %v149 = vcvt.s32.f32 %v133
    %v150 = vcvt.s32.f32 %v134
    %v151 = vcvt.s32.f32 %v135
    %v152 = vcvt.s32.f32 %v136
    %v153 = vcvt.s32.f32 %v137
    %v154 = vcvt.s32.f32 %v138
    %155 = vset.pattern.permute.xlu0 1
    %156 = vperm.xlu0 %155, %v41
    %v157 = vpop.permute.xlu0 %156
    %158 = vset.pattern.permute.xlu0 1
    %159 = vperm.xlu0 %158, %v42
    %v160 = vpop.permute.xlu0 %159
    %161 = vset.pattern.permute.xlu0 1
    %162 = vperm.xlu0 %161, %v43
    %v163 = vpop.permute.xlu0 %162
    %164 = vset.pattern.permute.xlu0 1
    %165 = vperm.xlu0 %164, %v44
    %v166 = vpop.permute.xlu0 %165
    %167 = vset.pattern.permute.xlu0 1
    %168 = vperm.xlu0 %167, %v45
    %v169 = vpop.permute.xlu0 %168
    %170 = vset.pattern.permute.xlu0 1
    %171 = vperm.xlu0 %170, %v46
    %v172 = vpop.permute.xlu0 %171
    %173 = vset.pattern.permute.xlu0 1
    %174 = vperm.xlu0 %173, %v47
    %v175 = vpop.permute.xlu0 %174
    %176 = vset.pattern.permute.xlu0 1
    %177 = vperm.xlu0 %176, %v48
    %v178 = vpop.permute.xlu0 %177
    %179 = vset.pattern.permute.xlu0 1
    %180 = vperm.xlu0 %179, %v49
    %v181 = vpop.permute.xlu0 %180
    %182 = vset.pattern.permute.xlu0 1
    %183 = vperm.xlu0 %182, %v50
    %v184 = vpop.permute.xlu0 %183
    %185 = vset.pattern.permute.xlu0 1
    %186 = vperm.xlu0 %185, %v51
    %v187 = vpop.permute.xlu0 %186
    %188 = vset.pattern.permute.xlu0 1
    %189 = vperm.xlu0 %188, %v52
    %v190 = vpop.permute.xlu0 %189
    %191 = vset.pattern.permute.xlu0 1
    %192 = vperm.xlu0 %191, %v53
    %v193 = vpop.permute.xlu0 %192
    %194 = vset.pattern.permute.xlu0 1
    %195 = vperm.xlu0 %194, %v54
    %v196 = vpop.permute.xlu0 %195
    %197 = vset.pattern.permute.xlu0 1
    %198 = vperm.xlu0 %197, %v55
    %v199 = vpop.permute.xlu0 %198
    %200 = vset.pattern.permute.xlu0 1
    %201 = vperm.xlu0 %200, %v56
    %v202 = vpop.permute.xlu0 %201
    %vm203 = vcmp.eq.s32.totalorder %v58, %v157
    %vm204 = vcmp.eq.s32.totalorder %v58, %v160
    %vm205 = vcmp.eq.s32.totalorder %v58, %v163
    %vm206 = vcmp.eq.s32.totalorder %v58, %v166
    %vm207 = vcmp.eq.s32.totalorder %v58, %v169
    %vm208 = vcmp.eq.s32.totalorder %v58, %v172
    %vm209 = vcmp.eq.s32.totalorder %v58, %v175
    %vm210 = vcmp.eq.s32.totalorder %v58, %v178
    %vm211 = vcmp.eq.s32.totalorder %v58, %v181
    %vm212 = vcmp.eq.s32.totalorder %v58, %v184
    %vm213 = vcmp.eq.s32.totalorder %v58, %v187
    %vm214 = vcmp.eq.s32.totalorder %v58, %v190
    %vm215 = vcmp.eq.s32.totalorder %v58, %v193
    %vm216 = vcmp.eq.s32.totalorder %v58, %v196
    %vm217 = vcmp.eq.s32.totalorder %v58, %v199
    %vm218 = vcmp.eq.s32.totalorder %v58, %v202
    %v219 = vsel %vm203, 1, 0
    %v220 = vsel %vm204, 1, 0
    %v221 = vsel %vm205, 1, 0
    %v222 = vsel %vm206, 1, 0
    %v223 = vsel %vm207, 1, 0
    %v224 = vsel %vm208, 1, 0
    %v225 = vsel %vm209, 1, 0
    %v226 = vsel %vm210, 1, 0
    %v227 = vsel %vm211, 1, 0
    %v228 = vsel %vm212, 1, 0
    %v229 = vsel %vm213, 1, 0
    %v230 = vsel %vm214, 1, 0
    %v231 = vsel %vm215, 1, 0
    %v232 = vsel %vm216, 1, 0
    %v233 = vsel %vm217, 1, 0
    %v234 = vsel %vm218, 1, 0
    %v235 = vcvt.s32.f32 %v219
    %v236 = vcvt.s32.f32 %v220
    %v237 = vcvt.s32.f32 %v221
    %v238 = vcvt.s32.f32 %v222
    %v239 = vcvt.s32.f32 %v223
    %v240 = vcvt.s32.f32 %v224
    %v241 = vcvt.s32.f32 %v225
    %v242 = vcvt.s32.f32 %v226
    %v243 = vcvt.s32.f32 %v227
    %v244 = vcvt.s32.f32 %v228
    %v245 = vcvt.s32.f32 %v229
    %v246 = vcvt.s32.f32 %v230
    %v247 = vcvt.s32.f32 %v231
    %v248 = vcvt.s32.f32 %v232
    %v249 = vcvt.s32.f32 %v233
    %v250 = vcvt.s32.f32 %v234
    %v251 = vadd.f32 %v139, %v235
    %v252 = vadd.f32 %v140, %v236
    %v253 = vadd.f32 %v141, %v237
    %v254 = vadd.f32 %v142, %v238
    %v255 = vadd.f32 %v143, %v239
    %v256 = vadd.f32 %v144, %v240
    %v257 = vadd.f32 %v145, %v241
    %v258 = vadd.f32 %v146, %v242
    %v259 = vadd.f32 %v147, %v243
    %v260 = vadd.f32 %v148, %v244
    %v261 = vadd.f32 %v149, %v245
    %v262 = vadd.f32 %v150, %v246
    %v263 = vadd.f32 %v151, %v247
    %v264 = vadd.f32 %v152, %v248
    %v265 = vadd.f32 %v153, %v249
    %v266 = vadd.f32 %v154, %v250
    %267 = vset.pattern.permute.xlu0 2
    %268 = vperm.xlu0 %267, %v41
    %v269 = vpop.permute.xlu0 %268
    %270 = vset.pattern.permute.xlu0 2
    %271 = vperm.xlu0 %270, %v42
    %v272 = vpop.permute.xlu0 %271
    %273 = vset.pattern.permute.xlu0 2
    %274 = vperm.xlu0 %273, %v43
    %v275 = vpop.permute.xlu0 %274
    %276 = vset.pattern.permute.xlu0 2
    %277 = vperm.xlu0 %276, %v44
    %v278 = vpop.permute.xlu0 %277
    %279 = vset.pattern.permute.xlu0 2
    %280 = vperm.xlu0 %279, %v45
    %v281 = vpop.permute.xlu0 %280
    %282 = vset.pattern.permute.xlu0 2
    %283 = vperm.xlu0 %282, %v46
    %v284 = vpop.permute.xlu0 %283
    %285 = vset.pattern.permute.xlu0 2
    %286 = vperm.xlu0 %285, %v47
    %v287 = vpop.permute.xlu0 %286
    %288 = vset.pattern.permute.xlu0 2
    %289 = vperm.xlu0 %288, %v48
    %v290 = vpop.permute.xlu0 %289
    %291 = vset.pattern.permute.xlu0 2
    %292 = vperm.xlu0 %291, %v49
    %v293 = vpop.permute.xlu0 %292
    %294 = vset.pattern.permute.xlu0 2
    %295 = vperm.xlu0 %294, %v50
    %v296 = vpop.permute.xlu0 %295
    %297 = vset.pattern.permute.xlu0 2
    %298 = vperm.xlu0 %297, %v51
    %v299 = vpop.permute.xlu0 %298
    %300 = vset.pattern.permute.xlu0 2
    %301 = vperm.xlu0 %300, %v52
    %v302 = vpop.permute.xlu0 %301
    %303 = vset.pattern.permute.xlu0 2
    %304 = vperm.xlu0 %303, %v53
    %v305 = vpop.permute.xlu0 %304
    %306 = vset.pattern.permute.xlu0 2
    %307 = vperm.xlu0 %306, %v54
    %v308 = vpop.permute.xlu0 %307
    %309 = vset.pattern.permute.xlu0 2
    %310 = vperm.xlu0 %309, %v55
    %v311 = vpop.permute.xlu0 %310
    %312 = vset.pattern.permute.xlu0 2
    %313 = vperm.xlu0 %312, %v56
    %v314 = vpop.permute.xlu0 %313
    %vm315 = vcmp.eq.s32.totalorder %v58, %v269
    %vm316 = vcmp.eq.s32.totalorder %v58, %v272
    %vm317 = vcmp.eq.s32.totalorder %v58, %v275
    %vm318 = vcmp.eq.s32.totalorder %v58, %v278
    %vm319 = vcmp.eq.s32.totalorder %v58, %v281
    %vm320 = vcmp.eq.s32.totalorder %v58, %v284
    %vm321 = vcmp.eq.s32.totalorder %v58, %v287
    %vm322 = vcmp.eq.s32.totalorder %v58, %v290
    %vm323 = vcmp.eq.s32.totalorder %v58, %v293
    %vm324 = vcmp.eq.s32.totalorder %v58, %v296
    %vm325 = vcmp.eq.s32.totalorder %v58, %v299
    %vm326 = vcmp.eq.s32.totalorder %v58, %v302
    %vm327 = vcmp.eq.s32.totalorder %v58, %v305
    %vm328 = vcmp.eq.s32.totalorder %v58, %v308
    %vm329 = vcmp.eq.s32.totalorder %v58, %v311
    %vm330 = vcmp.eq.s32.totalorder %v58, %v314
    %v331 = vsel %vm315, 1, 0
    %v332 = vsel %vm316, 1, 0
    %v333 = vsel %vm317, 1, 0
    %v334 = vsel %vm318, 1, 0
    %v335 = vsel %vm319, 1, 0
    %v336 = vsel %vm320, 1, 0
    %v337 = vsel %vm321, 1, 0
    %v338 = vsel %vm322, 1, 0
    %v339 = vsel %vm323, 1, 0
    %v340 = vsel %vm324, 1, 0
    %v341 = vsel %vm325, 1, 0
    %v342 = vsel %vm326, 1, 0
    %v343 = vsel %vm327, 1, 0
    %v344 = vsel %vm328, 1, 0
    %v345 = vsel %vm329, 1, 0
    %v346 = vsel %vm330, 1, 0
    %v347 = vcvt.s32.f32 %v331
    %v348 = vcvt.s32.f32 %v332
    %v349 = vcvt.s32.f32 %v333
    %v350 = vcvt.s32.f32 %v334
    %v351 = vcvt.s32.f32 %v335
    %v352 = vcvt.s32.f32 %v336
    %v353 = vcvt.s32.f32 %v337
    %v354 = vcvt.s32.f32 %v338
    %v355 = vcvt.s32.f32 %v339
    %v356 = vcvt.s32.f32 %v340
    %v357 = vcvt.s32.f32 %v341
    %v358 = vcvt.s32.f32 %v342
    %v359 = vcvt.s32.f32 %v343
    %v360 = vcvt.s32.f32 %v344
    %v361 = vcvt.s32.f32 %v345
    %v362 = vcvt.s32.f32 %v346
    %v363 = vadd.f32 %v251, %v347
    %v364 = vadd.f32 %v252, %v348
    %v365 = vadd.f32 %v253, %v349
    %v366 = vadd.f32 %v254, %v350
    %v367 = vadd.f32 %v255, %v351
    %v368 = vadd.f32 %v256, %v352
    %v369 = vadd.f32 %v257, %v353
    %v370 = vadd.f32 %v258, %v354
    %v371 = vadd.f32 %v259, %v355
    %v372 = vadd.f32 %v260, %v356
    %v373 = vadd.f32 %v261, %v357
    %v374 = vadd.f32 %v262, %v358
    %v375 = vadd.f32 %v263, %v359
    %v376 = vadd.f32 %v264, %v360
    %v377 = vadd.f32 %v265, %v361
    %v378 = vadd.f32 %v266, %v362
    %379 = vset.pattern.permute.xlu0 3
    %380 = vperm.xlu0 %379, %v41
    %v381 = vpop.permute.xlu0 %380
    %382 = vset.pattern.permute.xlu0 3
    %383 = vperm.xlu0 %382, %v42
    %v384 = vpop.permute.xlu0 %383
    %385 = vset.pattern.permute.xlu0 3
    %386 = vperm.xlu0 %385, %v43
    %v387 = vpop.permute.xlu0 %386
    %388 = vset.pattern.permute.xlu0 3
    %389 = vperm.xlu0 %388, %v44
    %v390 = vpop.permute.xlu0 %389
    %391 = vset.pattern.permute.xlu0 3
    %392 = vperm.xlu0 %391, %v45
    %v393 = vpop.permute.xlu0 %392
    %394 = vset.pattern.permute.xlu0 3
    %395 = vperm.xlu0 %394, %v46
    %v396 = vpop.permute.xlu0 %395
    %397 = vset.pattern.permute.xlu0 3
    %398 = vperm.xlu0 %397, %v47
    %v399 = vpop.permute.xlu0 %398
    %400 = vset.pattern.permute.xlu0 3
    %401 = vperm.xlu0 %400, %v48
    %v402 = vpop.permute.xlu0 %401
    %403 = vset.pattern.permute.xlu0 3
    %404 = vperm.xlu0 %403, %v49
    %v405 = vpop.permute.xlu0 %404
    %406 = vset.pattern.permute.xlu0 3
    %407 = vperm.xlu0 %406, %v50
    %v408 = vpop.permute.xlu0 %407
    %409 = vset.pattern.permute.xlu0 3
    %410 = vperm.xlu0 %409, %v51
    %v411 = vpop.permute.xlu0 %410
    %412 = vset.pattern.permute.xlu0 3
    %413 = vperm.xlu0 %412, %v52
    %v414 = vpop.permute.xlu0 %413
    %415 = vset.pattern.permute.xlu0 3
    %416 = vperm.xlu0 %415, %v53
    %v417 = vpop.permute.xlu0 %416
    %418 = vset.pattern.permute.xlu0 3
    %419 = vperm.xlu0 %418, %v54
    %v420 = vpop.permute.xlu0 %419
    %421 = vset.pattern.permute.xlu0 3
    %422 = vperm.xlu0 %421, %v55
    %v423 = vpop.permute.xlu0 %422
    %424 = vset.pattern.permute.xlu0 3
    %425 = vperm.xlu0 %424, %v56
    %v426 = vpop.permute.xlu0 %425
    %vm427 = vcmp.eq.s32.totalorder %v58, %v381
    %vm428 = vcmp.eq.s32.totalorder %v58, %v384
    %vm429 = vcmp.eq.s32.totalorder %v58, %v387
    %vm430 = vcmp.eq.s32.totalorder %v58, %v390
    %vm431 = vcmp.eq.s32.totalorder %v58, %v393
    %vm432 = vcmp.eq.s32.totalorder %v58, %v396
    %vm433 = vcmp.eq.s32.totalorder %v58, %v399
    %vm434 = vcmp.eq.s32.totalorder %v58, %v402
    %vm435 = vcmp.eq.s32.totalorder %v58, %v405
    %vm436 = vcmp.eq.s32.totalorder %v58, %v408
    %vm437 = vcmp.eq.s32.totalorder %v58, %v411
    %vm438 = vcmp.eq.s32.totalorder %v58, %v414
    %vm439 = vcmp.eq.s32.totalorder %v58, %v417
    %vm440 = vcmp.eq.s32.totalorder %v58, %v420
    %vm441 = vcmp.eq.s32.totalorder %v58, %v423
    %vm442 = vcmp.eq.s32.totalorder %v58, %v426
    %v443 = vsel %vm427, 1, 0
    %v444 = vsel %vm428, 1, 0
    %v445 = vsel %vm429, 1, 0
    %v446 = vsel %vm430, 1, 0
    %v447 = vsel %vm431, 1, 0
    %v448 = vsel %vm432, 1, 0
    %v449 = vsel %vm433, 1, 0
    %v450 = vsel %vm434, 1, 0
    %v451 = vsel %vm435, 1, 0
    %v452 = vsel %vm436, 1, 0
    %v453 = vsel %vm437, 1, 0
    %v454 = vsel %vm438, 1, 0
    %v455 = vsel %vm439, 1, 0
    %v456 = vsel %vm440, 1, 0
    %v457 = vsel %vm441, 1, 0
    %v458 = vsel %vm442, 1, 0
    %v459 = vcvt.s32.f32 %v443
    %v460 = vcvt.s32.f32 %v444
    %v461 = vcvt.s32.f32 %v445
    %v462 = vcvt.s32.f32 %v446
    %v463 = vcvt.s32.f32 %v447
    %v464 = vcvt.s32.f32 %v448
    %v465 = vcvt.s32.f32 %v449
    %v466 = vcvt.s32.f32 %v450
    %v467 = vcvt.s32.f32 %v451
    %v468 = vcvt.s32.f32 %v452
    %v469 = vcvt.s32.f32 %v453
    %v470 = vcvt.s32.f32 %v454
    %v471 = vcvt.s32.f32 %v455
    %v472 = vcvt.s32.f32 %v456
    %v473 = vcvt.s32.f32 %v457
    %v474 = vcvt.s32.f32 %v458
    %v475 = vadd.f32 %v363, %v459
    %v476 = vadd.f32 %v364, %v460
    %v477 = vadd.f32 %v365, %v461
    %v478 = vadd.f32 %v366, %v462
    %v479 = vadd.f32 %v367, %v463
    %v480 = vadd.f32 %v368, %v464
    %v481 = vadd.f32 %v369, %v465
    %v482 = vadd.f32 %v370, %v466
    %v483 = vadd.f32 %v371, %v467
    %v484 = vadd.f32 %v372, %v468
    %v485 = vadd.f32 %v373, %v469
    %v486 = vadd.f32 %v374, %v470
    %v487 = vadd.f32 %v375, %v471
    %v488 = vadd.f32 %v376, %v472
    %v489 = vadd.f32 %v377, %v473
    %v490 = vadd.f32 %v378, %v474
    %v491 = vld [vmem:[%s1] sm:$0x1]
    %v492 = vld [vmem:[%s2] sm:$0xff]
    %v493 = vld [vmem:[%s2 + $0x8] sm:$0xff]
    %v494 = vld [vmem:[%s2 + $0x10] sm:$0xff]
    %v495 = vld [vmem:[%s2 + $0x18] sm:$0xff]
    %v496 = vld [vmem:[%s2 + $0x20] sm:$0xff]
    %v497 = vld [vmem:[%s2 + $0x28] sm:$0xff]
    %v498 = vld [vmem:[%s2 + $0x30] sm:$0xff]
    %v499 = vld [vmem:[%s2 + $0x38] sm:$0xff]
    %v500 = vld [vmem:[%s2 + $0x40] sm:$0xff]
    %v501 = vld [vmem:[%s2 + $0x48] sm:$0xff]
    %v502 = vld [vmem:[%s2 + $0x50] sm:$0xff]
    %v503 = vld [vmem:[%s2 + $0x58] sm:$0xff]
    %v504 = vld [vmem:[%s2 + $0x60] sm:$0xff]
    %v505 = vld [vmem:[%s2 + $0x68] sm:$0xff]
    %v506 = vld [vmem:[%s2 + $0x70] sm:$0xff]
    %v507 = vld [vmem:[%s2 + $0x78] sm:$0xff]
    %v508 = vld [vmem:[%s3] sm:$0x1]
    %v510 = vlaneseq
    %v511 = vshrl.u32 %v510, 7
    %v512 = vsub.s32 0, %v511
    %v513 = vrot.slane %v508, %v512
    %515 = vmatprep.subr.mxu0 0.0
    %516 = vmatpush1.msra.mxu0 %v507
    %517 = vmatprep.subr.mxu0 0.0
    %518 = vmatpush1.msra.mxu0 %v506
    %519 = vmatprep.subr.mxu0 0.0
    %520 = vmatpush1.msra.mxu0 %v505
    %521 = vmatprep.subr.mxu0 0.0
    %522 = vmatpush1.msra.mxu0 %v504
    %523 = vmatprep.subr.mxu0 0.0
    %524 = vmatpush1.msra.mxu0 %v503
    %525 = vmatprep.subr.mxu0 0.0
    %526 = vmatpush1.msra.mxu0 %v502
    %527 = vmatprep.subr.mxu0 0.0
    %528 = vmatpush1.msra.mxu0 %v501
    %529 = vmatprep.subr.mxu0 0.0
    %530 = vmatpush1.msra.mxu0 %v500
    %531 = vmatprep.subr.mxu0 0.0
    %532 = vmatpush1.msra.mxu0 %v499
    %533 = vmatprep.subr.mxu0 0.0
    %534 = vmatpush1.msra.mxu0 %v498
    %535 = vmatprep.subr.mxu0 0.0
    %536 = vmatpush1.msra.mxu0 %v497
    %537 = vmatprep.subr.mxu0 0.0
    %538 = vmatpush1.msra.mxu0 %v496
    %539 = vmatprep.subr.mxu0 0.0
    %540 = vmatpush1.msra.mxu0 %v495
    %541 = vmatprep.subr.mxu0 0.0
    %542 = vmatpush1.msra.mxu0 %v494
    %543 = vmatprep.subr.mxu0 0.0
    %544 = vmatpush1.msra.mxu0 %v493
    %545 = vmatprep.subr.mxu0 0.0
    %546 = vmatpush1.msra.mxu0 %v492
    %547 = vmatprep.subr.mxu0 0.0
    %548 = vmatpush2.msra.mxu0 0.0
    %549 = vmatprep.subr.mxu0 0.0
    %550 = vmatpush2.msra.mxu0 0.0
    %551 = vmatprep.subr.mxu0 0.0
    %552 = vmatpush2.msra.mxu0 0.0
    %553 = vmatprep.subr.mxu0 0.0
    %554 = vmatpush2.msra.mxu0 0.0
    %555 = vmatprep.subr.mxu0 0.0
    %556 = vmatpush2.msra.mxu0 0.0
    %557 = vmatprep.subr.mxu0 0.0
    %558 = vmatpush2.msra.mxu0 0.0
    %559 = vmatprep.subr.mxu0 0.0
    %560 = vmatpush2.msra.mxu0 0.0
    %561 = vmatprep.subr.mxu0 0.0
    %562 = vmatpush2.msra.mxu0 0.0
    %563 = vmatprep.subr.mxu0 0.0
    %564 = vmatpush2.msra.mxu0 0.0
    %565 = vmatprep.subr.mxu0 0.0
    %566 = vmatpush2.msra.mxu0 0.0
    %567 = vmatprep.subr.mxu0 0.0
    %568 = vmatpush2.msra.mxu0 0.0
    %569 = vmatprep.subr.mxu0 0.0
    %570 = vmatpush2.msra.mxu0 0.0
    %571 = vmatprep.subr.mxu0 0.0
    %572 = vmatpush2.msra.mxu0 0.0
    %573 = vmatprep.subr.mxu0 0.0
    %574 = vmatpush2.msra.mxu0 0.0
    %575 = vmatprep.subr.mxu0 0.0
    %576 = vmatpush2.msra.mxu0 0.0
    %577 = vmatprep.subr.mxu0 0.0
    %578 = vmatpush2.msra.mxu0 0.0
    %579 = vmatprep.mubr.f32.mxu0 0.0
    %580 = vmatmul.mubr.f32.gmra.mxu0 %v475
    %v581 = vpop.f32.mrf.mxu0
    %v582 = vadd.f32 %v513, %v581
    %v583 = vpop.f32.mrf.mxu0
    %584 = vmatprep.mubr.f32.mxu0 0.0
    %585 = vmatmul.mubr.f32.gmra.mxu0 %v476
    %v586 = vpop.f32.mrf.mxu0
    %v587 = vadd.f32 %v513, %v586
    %v588 = vpop.f32.mrf.mxu0
    %589 = vmatprep.mubr.f32.mxu0 0.0
    %590 = vmatmul.mubr.f32.gmra.mxu0 %v477
    %v591 = vpop.f32.mrf.mxu0
    %v592 = vadd.f32 %v513, %v591
    %v593 = vpop.f32.mrf.mxu0
    %594 = vmatprep.mubr.f32.mxu0 0.0
    %595 = vmatmul.mubr.f32.gmra.mxu0 %v478
    %v596 = vpop.f32.mrf.mxu0
    %v597 = vadd.f32 %v513, %v596
    %v598 = vpop.f32.mrf.mxu0
    %599 = vmatprep.mubr.f32.mxu0 0.0
    %600 = vmatmul.mubr.f32.gmra.mxu0 %v479
    %v601 = vpop.f32.mrf.mxu0
    %v602 = vadd.f32 %v513, %v601
    %v603 = vpop.f32.mrf.mxu0
    %604 = vmatprep.mubr.f32.mxu0 0.0
    %605 = vmatmul.mubr.f32.gmra.mxu0 %v480
    %v606 = vpop.f32.mrf.mxu0
    %v607 = vadd.f32 %v513, %v606
    %v608 = vpop.f32.mrf.mxu0
    %609 = vmatprep.mubr.f32.mxu0 0.0
    %610 = vmatmul.mubr.f32.gmra.mxu0 %v481
    %v611 = vpop.f32.mrf.mxu0
    %v612 = vadd.f32 %v513, %v611
    %v613 = vpop.f32.mrf.mxu0
    %614 = vmatprep.mubr.f32.mxu0 0.0
    %615 = vmatmul.mubr.f32.gmra.mxu0 %v482
    %v616 = vpop.f32.mrf.mxu0
    %v617 = vadd.f32 %v513, %v616
    %v618 = vpop.f32.mrf.mxu0
    %619 = vmatprep.mubr.f32.mxu0 0.0
    %620 = vmatmul.mubr.f32.gmra.mxu0 %v483
    %v621 = vpop.f32.mrf.mxu0
    %v622 = vadd.f32 %v513, %v621
    %v623 = vpop.f32.mrf.mxu0
    %624 = vmatprep.mubr.f32.mxu0 0.0
    %625 = vmatmul.mubr.f32.gmra.mxu0 %v484
    %v626 = vpop.f32.mrf.mxu0
    %v627 = vadd.f32 %v513, %v626
    %v628 = vpop.f32.mrf.mxu0
    %629 = vmatprep.mubr.f32.mxu0 0.0
    %630 = vmatmul.mubr.f32.gmra.mxu0 %v485
    %v631 = vpop.f32.mrf.mxu0
    %v632 = vadd.f32 %v513, %v631
    %v633 = vpop.f32.mrf.mxu0
    %634 = vmatprep.mubr.f32.mxu0 0.0
    %635 = vmatmul.mubr.f32.gmra.mxu0 %v486
    %v636 = vpop.f32.mrf.mxu0
    %v637 = vadd.f32 %v513, %v636
    %v638 = vpop.f32.mrf.mxu0
    %639 = vmatprep.mubr.f32.mxu0 0.0
    %640 = vmatmul.mubr.f32.gmra.mxu0 %v487
    %v641 = vpop.f32.mrf.mxu0
    %v642 = vadd.f32 %v513, %v641
    %v643 = vpop.f32.mrf.mxu0
    %644 = vmatprep.mubr.f32.mxu0 0.0
    %645 = vmatmul.mubr.f32.gmra.mxu0 %v488
    %v646 = vpop.f32.mrf.mxu0
    %v647 = vadd.f32 %v513, %v646
    %v648 = vpop.f32.mrf.mxu0
    %649 = vmatprep.mubr.f32.mxu0 0.0
    %650 = vmatmul.mubr.f32.gmra.mxu0 %v489
    %v651 = vpop.f32.mrf.mxu0
    %v652 = vadd.f32 %v513, %v651
    %v653 = vpop.f32.mrf.mxu0
    %654 = vmatprep.mubr.f32.mxu0 0.0
    %655 = vmatmul.mubr.f32.gmra.mxu0 %v490
    %v656 = vpop.f32.mrf.mxu0
    %v657 = vadd.f32 %v513, %v656
    %v658 = vpop.f32.mrf.mxu0
    %659 = vdwg.mxu0
    %v660 = vmax.f32 %v582, 0.0
    %v661 = vmax.f32 %v587, 0.0
    %v662 = vmax.f32 %v592, 0.0
    %v663 = vmax.f32 %v597, 0.0
    %v664 = vmax.f32 %v602, 0.0
    %v665 = vmax.f32 %v607, 0.0
    %v666 = vmax.f32 %v612, 0.0
    %v667 = vmax.f32 %v617, 0.0
    %v668 = vmax.f32 %v622, 0.0
    %v669 = vmax.f32 %v627, 0.0
    %v670 = vmax.f32 %v632, 0.0
    %v671 = vmax.f32 %v637, 0.0
    %v672 = vmax.f32 %v642, 0.0
    %v673 = vmax.f32 %v647, 0.0
    %v674 = vmax.f32 %v652, 0.0
    %v675 = vmax.f32 %v657, 0.0
    %v676 = vld [vmem:[#allocation2] sm:$0xff]
    %v677 = vld [vmem:[#allocation2 + $0x8] sm:$0xff]
    %v678 = vld [vmem:[#allocation2 + $0x10] sm:$0xff]
    %v679 = vld [vmem:[#allocation2 + $0x18] sm:$0xff]
    %v680 = vld [vmem:[#allocation2 + $0x20] sm:$0xff]
    %v681 = vld [vmem:[#allocation2 + $0x28] sm:$0xff]
    %v682 = vld [vmem:[#allocation2 + $0x30] sm:$0xff]
    %v683 = vld [vmem:[#allocation2 + $0x38] sm:$0xff]
    %v684 = vld [vmem:[#allocation2 + $0x40] sm:$0xff]
    %v685 = vld [vmem:[#allocation2 + $0x48] sm:$0xff]
    %v686 = vld [vmem:[#allocation2 + $0x50] sm:$0xff]
    %v687 = vld [vmem:[#allocation2 + $0x58] sm:$0xff]
    %v688 = vld [vmem:[#allocation2 + $0x60] sm:$0xff]
    %v689 = vld [vmem:[#allocation2 + $0x68] sm:$0xff]
    %v690 = vld [vmem:[#allocation2 + $0x70] sm:$0xff]
    %v691 = vld [vmem:[#allocation2 + $0x78] sm:$0xff]
    %v692 = vld [vmem:[%s5] sm:$0x1]
    %v694 = vlaneseq
    %v695 = vshrl.u32 %v694, 7
    %v696 = vsub.s32 0, %v695
    %v697 = vrot.slane %v692, %v696
    %699 = vmatprep.subr.mxu0 0.0
    %700 = vmatpush1.msra.mxu0 %v691
    %701 = vmatprep.subr.mxu0 0.0
    %702 = vmatpush1.msra.mxu0 %v690
    %703 = vmatprep.subr.mxu0 0.0
    %704 = vmatpush1.msra.mxu0 %v689
    %705 = vmatprep.subr.mxu0 0.0
    %706 = vmatpush1.msra.mxu0 %v688
    %707 = vmatprep.subr.mxu0 0.0
    %708 = vmatpush1.msra.mxu0 %v687
    %709 = vmatprep.subr.mxu0 0.0
    %710 = vmatpush1.msra.mxu0 %v686
    %711 = vmatprep.subr.mxu0 0.0
    %712 = vmatpush1.msra.mxu0 %v685
    %713 = vmatprep.subr.mxu0 0.0
    %714 = vmatpush1.msra.mxu0 %v684
    %715 = vmatprep.subr.mxu0 0.0
    %716 = vmatpush1.msra.mxu0 %v683
    %717 = vmatprep.subr.mxu0 0.0
    %718 = vmatpush1.msra.mxu0 %v682
    %719 = vmatprep.subr.mxu0 0.0
    %720 = vmatpush1.msra.mxu0 %v681
    %721 = vmatprep.subr.mxu0 0.0
    %722 = vmatpush1.msra.mxu0 %v680
    %723 = vmatprep.subr.mxu0 0.0
    %724 = vmatpush1.msra.mxu0 %v679
    %725 = vmatprep.subr.mxu0 0.0
    %726 = vmatpush1.msra.mxu0 %v678
    %727 = vmatprep.subr.mxu0 0.0
    %728 = vmatpush1.msra.mxu0 %v677
    %729 = vmatprep.subr.mxu0 0.0
    %730 = vmatpush1.msra.mxu0 %v676
    %731 = vmatprep.subr.mxu0 0.0
    %732 = vmatpush2.msra.mxu0 0.0
    %733 = vmatprep.subr.mxu0 0.0
    %734 = vmatpush2.msra.mxu0 0.0
    %735 = vmatprep.subr.mxu0 0.0
    %736 = vmatpush2.msra.mxu0 0.0
    %737 = vmatprep.subr.mxu0 0.0
    %738 = vmatpush2.msra.mxu0 0.0
    %739 = vmatprep.subr.mxu0 0.0
    %740 = vmatpush2.msra.mxu0 0.0
    %741 = vmatprep.subr.mxu0 0.0
    %742 = vmatpush2.msra.mxu0 0.0
    %743 = vmatprep.subr.mxu0 0.0
    %744 = vmatpush2.msra.mxu0 0.0
    %745 = vmatprep.subr.mxu0 0.0
    %746 = vmatpush2.msra.mxu0 0.0
    %747 = vmatprep.subr.mxu0 0.0
    %748 = vmatpush2.msra.mxu0 0.0
    %749 = vmatprep.subr.mxu0 0.0
    %750 = vmatpush2.msra.mxu0 0.0
    %751 = vmatprep.subr.mxu0 0.0
    %752 = vmatpush2.msra.mxu0 0.0
    %753 = vmatprep.subr.mxu0 0.0
    %754 = vmatpush2.msra.mxu0 0.0
    %755 = vmatprep.subr.mxu0 0.0
    %756 = vmatpush2.msra.mxu0 0.0
    %757 = vmatprep.subr.mxu0 0.0
    %758 = vmatpush2.msra.mxu0 0.0
    %759 = vmatprep.subr.mxu0 0.0
    %760 = vmatpush2.msra.mxu0 0.0
    %761 = vmatprep.subr.mxu0 0.0
    %762 = vmatpush2.msra.mxu0 0.0
    %763 = vmatprep.mubr.f32.mxu0 0.0
    %764 = vmatmul.mubr.f32.gmra.mxu0 %v660
    %v765 = vpop.f32.mrf.mxu0
    %v766 = vadd.f32 %v697, %v765
    %v767 = vpop.f32.mrf.mxu0
    %768 = vmatprep.mubr.f32.mxu0 0.0
    %769 = vmatmul.mubr.f32.gmra.mxu0 %v661
    %v770 = vpop.f32.mrf.mxu0
    %v771 = vadd.f32 %v697, %v770
    %v772 = vpop.f32.mrf.mxu0
    %773 = vmatprep.mubr.f32.mxu0 0.0
    %774 = vmatmul.mubr.f32.gmra.mxu0 %v662
    %v775 = vpop.f32.mrf.mxu0
    %v776 = vadd.f32 %v697, %v775
    %v777 = vpop.f32.mrf.mxu0
    %778 = vmatprep.mubr.f32.mxu0 0.0
    %779 = vmatmul.mubr.f32.gmra.mxu0 %v663
    %v780 = vpop.f32.mrf.mxu0
    %v781 = vadd.f32 %v697, %v780
    %v782 = vpop.f32.mrf.mxu0
    %783 = vmatprep.mubr.f32.mxu0 0.0
    %784 = vmatmul.mubr.f32.gmra.mxu0 %v664
    %v785 = vpop.f32.mrf.mxu0
    %v786 = vadd.f32 %v697, %v785
    %v787 = vpop.f32.mrf.mxu0
    %788 = vmatprep.mubr.f32.mxu0 0.0
    %789 = vmatmul.mubr.f32.gmra.mxu0 %v665
    %v790 = vpop.f32.mrf.mxu0
    %v791 = vadd.f32 %v697, %v790
    %v792 = vpop.f32.mrf.mxu0
    %793 = vmatprep.mubr.f32.mxu0 0.0
    %794 = vmatmul.mubr.f32.gmra.mxu0 %v666
    %v795 = vpop.f32.mrf.mxu0
    %v796 = vadd.f32 %v697, %v795
    %v797 = vpop.f32.mrf.mxu0
    %798 = vmatprep.mubr.f32.mxu0 0.0
    %799 = vmatmul.mubr.f32.gmra.mxu0 %v667
    %v800 = vpop.f32.mrf.mxu0
    %v801 = vadd.f32 %v697, %v800
    %v802 = vpop.f32.mrf.mxu0
    %803 = vmatprep.mubr.f32.mxu0 0.0
    %804 = vmatmul.mubr.f32.gmra.mxu0 %v668
    %v805 = vpop.f32.mrf.mxu0
    %v806 = vadd.f32 %v697, %v805
    %v807 = vpop.f32.mrf.mxu0
    %808 = vmatprep.mubr.f32.mxu0 0.0
    %809 = vmatmul.mubr.f32.gmra.mxu0 %v669
    %v810 = vpop.f32.mrf.mxu0
    %v811 = vadd.f32 %v697, %v810
    %v812 = vpop.f32.mrf.mxu0
    %813 = vmatprep.mubr.f32.mxu0 0.0
    %814 = vmatmul.mubr.f32.gmra.mxu0 %v670
    %v815 = vpop.f32.mrf.mxu0
    %v816 = vadd.f32 %v697, %v815
    %v817 = vpop.f32.mrf.mxu0
    %818 = vmatprep.mubr.f32.mxu0 0.0
    %819 = vmatmul.mubr.f32.gmra.mxu0 %v671
    %v820 = vpop.f32.mrf.mxu0
    %v821 = vadd.f32 %v697, %v820
    %v822 = vpop.f32.mrf.mxu0
    %823 = vmatprep.mubr.f32.mxu0 0.0
    %824 = vmatmul.mubr.f32.gmra.mxu0 %v672
    %v825 = vpop.f32.mrf.mxu0
    %v826 = vadd.f32 %v697, %v825
    %v827 = vpop.f32.mrf.mxu0
    %828 = vmatprep.mubr.f32.mxu0 0.0
    %829 = vmatmul.mubr.f32.gmra.mxu0 %v673
    %v830 = vpop.f32.mrf.mxu0
    %v831 = vadd.f32 %v697, %v830
    %v832 = vpop.f32.mrf.mxu0
    %833 = vmatprep.mubr.f32.mxu0 0.0
    %834 = vmatmul.mubr.f32.gmra.mxu0 %v674
    %v835 = vpop.f32.mrf.mxu0
    %v836 = vadd.f32 %v697, %v835
    %v837 = vpop.f32.mrf.mxu0
    %838 = vmatprep.mubr.f32.mxu0 0.0
    %839 = vmatmul.mubr.f32.gmra.mxu0 %v675
    %v840 = vpop.f32.mrf.mxu0
    %v841 = vadd.f32 %v697, %v840
    %v842 = vpop.f32.mrf.mxu0
    %843 = vdwg.mxu0
    %v844 = vmax.f32 %v766, 0.0
    %v845 = vmax.f32 %v771, 0.0
    %v846 = vmax.f32 %v776, 0.0
    %v847 = vmax.f32 %v781, 0.0
    %v848 = vmax.f32 %v786, 0.0
    %v849 = vmax.f32 %v791, 0.0
    %v850 = vmax.f32 %v796, 0.0
    %v851 = vmax.f32 %v801, 0.0
    %v852 = vmax.f32 %v806, 0.0
    %v853 = vmax.f32 %v811, 0.0
    %v854 = vmax.f32 %v816, 0.0
    %v855 = vmax.f32 %v821, 0.0
    %v856 = vmax.f32 %v826, 0.0
    %v857 = vmax.f32 %v831, 0.0
    %v858 = vmax.f32 %v836, 0.0
    %v859 = vmax.f32 %v841, 0.0
    %v860 = vld [vmem:[%s6] sm:$0x1]
    %861 = vmatprep.subr.mxu0 0.0
    %862 = vmatpush1.xpose.msra.mxu0 %v859
    %863 = vmatprep.subr.mxu0 0.0
    %864 = vmatpush1.xpose.msra.mxu0 %v858
    %865 = vmatprep.subr.mxu0 0.0
    %866 = vmatpush1.xpose.msra.mxu0 %v857
    %867 = vmatprep.subr.mxu0 0.0
    %868 = vmatpush1.xpose.msra.mxu0 %v856
    %869 = vmatprep.subr.mxu0 0.0
    %870 = vmatpush1.xpose.msra.mxu0 %v855
    %871 = vmatprep.subr.mxu0 0.0
    %872 = vmatpush1.xpose.msra.mxu0 %v854
    %873 = vmatprep.subr.mxu0 0.0
    %874 = vmatpush1.xpose.msra.mxu0 %v853
    %875 = vmatprep.subr.mxu0 0.0
    %876 = vmatpush1.xpose.msra.mxu0 %v852
    %877 = vmatprep.subr.mxu0 0.0
    %878 = vmatpush1.xpose.msra.mxu0 %v851
    %879 = vmatprep.subr.mxu0 0.0
    %880 = vmatpush1.xpose.msra.mxu0 %v850
    %881 = vmatprep.subr.mxu0 0.0
    %882 = vmatpush1.xpose.msra.mxu0 %v849
    %883 = vmatprep.subr.mxu0 0.0
    %884 = vmatpush1.xpose.msra.mxu0 %v848
    %885 = vmatprep.subr.mxu0 0.0
    %886 = vmatpush1.xpose.msra.mxu0 %v847
    %887 = vmatprep.subr.mxu0 0.0
    %888 = vmatpush1.xpose.msra.mxu0 %v846
    %889 = vmatprep.subr.mxu0 0.0
    %890 = vmatpush1.xpose.msra.mxu0 %v845
    %891 = vmatprep.subr.mxu0 0.0
    %892 = vmatpush1.xpose.msra.mxu0 %v844
    %893 = vmatprep.subr.mxu0 0.0
    %894 = vmatpush2.xpose.msra.mxu0 0.0
    %895 = vmatprep.subr.mxu0 0.0
    %896 = vmatpush2.xpose.msra.mxu0 0.0
    %897 = vmatprep.subr.mxu0 0.0
    %898 = vmatpush2.xpose.msra.mxu0 0.0
    %899 = vmatprep.subr.mxu0 0.0
    %900 = vmatpush2.xpose.msra.mxu0 0.0
    %901 = vmatprep.subr.mxu0 0.0
    %902 = vmatpush2.xpose.msra.mxu0 0.0
    %903 = vmatprep.subr.mxu0 0.0
    %904 = vmatpush2.xpose.msra.mxu0 0.0
    %905 = vmatprep.subr.mxu0 0.0
    %906 = vmatpush2.xpose.msra.mxu0 0.0
    %907 = vmatprep.subr.mxu0 0.0
    %908 = vmatpush2.xpose.msra.mxu0 0.0
    %909 = vmatprep.subr.mxu0 0.0
    %910 = vmatpush2.xpose.msra.mxu0 0.0
    %911 = vmatprep.subr.mxu0 0.0
    %912 = vmatpush2.xpose.msra.mxu0 0.0
    %913 = vmatprep.subr.mxu0 0.0
    %914 = vmatpush2.xpose.msra.mxu0 0.0
    %915 = vmatprep.subr.mxu0 0.0
    %916 = vmatpush2.xpose.msra.mxu0 0.0
    %917 = vmatprep.subr.mxu0 0.0
    %918 = vmatpush2.xpose.msra.mxu0 0.0
    %919 = vmatprep.subr.mxu0 0.0
    %920 = vmatpush2.xpose.msra.mxu0 0.0
    %921 = vmatprep.subr.mxu0 0.0
    %922 = vmatpush2.xpose.msra.mxu0 0.0
    %923 = vmatprep.subr.mxu0 0.0
    %924 = vmatpush2.xpose.msra.mxu0 0.0
    %925 = vmatprep.mubr.f32.mxu0 0.0
    %926 = vmatmul.mubr.f32.gmra.mxu0 %v860
    %v927 = vpop.f32.mrf.mxu0
    %v928 = vadd.f32 0.0, %v927
    %v929 = vpop.f32.mrf.mxu0
    %930 = vdwg.mxu0
    %931 = vmatprep.subr.mxu0 0.0
    %932 = vmatpush1.xpose.msra.mxu0 %v490
    %933 = vmatprep.subr.mxu0 0.0
    %934 = vmatpush1.xpose.msra.mxu0 %v489
    %935 = vmatprep.subr.mxu0 0.0
    %936 = vmatpush1.xpose.msra.mxu0 %v488
    %937 = vmatprep.subr.mxu0 0.0
    %938 = vmatpush1.xpose.msra.mxu0 %v487
    %939 = vmatprep.subr.mxu0 0.0
    %940 = vmatpush1.xpose.msra.mxu0 %v486
    %941 = vmatprep.subr.mxu0 0.0
    %942 = vmatpush1.xpose.msra.mxu0 %v485
    %943 = vmatprep.subr.mxu0 0.0
    %944 = vmatpush1.xpose.msra.mxu0 %v484
    %945 = vmatprep.subr.mxu0 0.0
    %946 = vmatpush1.xpose.msra.mxu0 %v483
    %947 = vmatprep.subr.mxu0 0.0
    %948 = vmatpush1.xpose.msra.mxu0 %v482
    %949 = vmatprep.subr.mxu0 0.0
    %950 = vmatpush1.xpose.msra.mxu0 %v481
    %951 = vmatprep.subr.mxu0 0.0
    %952 = vmatpush1.xpose.msra.mxu0 %v480
    %953 = vmatprep.subr.mxu0 0.0
    %954 = vmatpush1.xpose.msra.mxu0 %v479
    %955 = vmatprep.subr.mxu0 0.0
    %956 = vmatpush1.xpose.msra.mxu0 %v478
    %957 = vmatprep.subr.mxu0 0.0
    %958 = vmatpush1.xpose.msra.mxu0 %v477
    %959 = vmatprep.subr.mxu0 0.0
    %960 = vmatpush1.xpose.msra.mxu0 %v476
    %961 = vmatprep.subr.mxu0 0.0
    %962 = vmatpush1.xpose.msra.mxu0 %v475
    %963 = vmatprep.subr.mxu0 0.0
    %964 = vmatpush2.xpose.msra.mxu0 0.0
    %965 = vmatprep.subr.mxu0 0.0
    %966 = vmatpush2.xpose.msra.mxu0 0.0
    %967 = vmatprep.subr.mxu0 0.0
    %968 = vmatpush2.xpose.msra.mxu0 0.0
    %969 = vmatprep.subr.mxu0 0.0
    %970 = vmatpush2.xpose.msra.mxu0 0.0
    %971 = vmatprep.subr.mxu0 0.0
    %972 = vmatpush2.xpose.msra.mxu0 0.0
    %973 = vmatprep.subr.mxu0 0.0
    %974 = vmatpush2.xpose.msra.mxu0 0.0
    %975 = vmatprep.subr.mxu0 0.0
    %976 = vmatpush2.xpose.msra.mxu0 0.0
    %977 = vmatprep.subr.mxu0 0.0
    %978 = vmatpush2.xpose.msra.mxu0 0.0
    %979 = vmatprep.subr.mxu0 0.0
    %980 = vmatpush2.xpose.msra.mxu0 0.0
    %981 = vmatprep.subr.mxu0 0.0
    %982 = vmatpush2.xpose.msra.mxu0 0.0
    %983 = vmatprep.subr.mxu0 0.0
    %984 = vmatpush2.xpose.msra.mxu0 0.0
    %985 = vmatprep.subr.mxu0 0.0
    %986 = vmatpush2.xpose.msra.mxu0 0.0
    %987 = vmatprep.subr.mxu0 0.0
    %988 = vmatpush2.xpose.msra.mxu0 0.0
    %989 = vmatprep.subr.mxu0 0.0
    %990 = vmatpush2.xpose.msra.mxu0 0.0
    %991 = vmatprep.subr.mxu0 0.0
    %992 = vmatpush2.xpose.msra.mxu0 0.0
    %993 = vmatprep.subr.mxu0 0.0
    %994 = vmatpush2.xpose.msra.mxu0 0.0
    %995 = vmatprep.mubr.f32.mxu0 0.0
    %996 = vmatmul.mubr.f32.gmra.mxu0 %v491
    %v997 = vpop.f32.mrf.mxu0
    %v998 = vadd.f32 %v928, %v997
    %v999 = vpop.f32.mrf.mxu0
    %1000 = vdwg.mxu0
    %1001 = vst [vmem:[#allocation5] sm:$0x1] %v998
    // Predicated region
    $region34: #{tpu_custom_call.1} parent=1 // pred_check
      _
    $region35: #{tpu_custom_call.1} parent=1 // pred_check_branch
      %1003 = sbr.rel (0) target = $region37
    $region36: #{tpu_custom_call.1} parent=1 // pred_region
      %s1005 = ssub.s32 16, 16
      %1006 = vsyncadd [#allocation4], %s1005
      %s1008 = sshll.u32 [#allocation5], 4
      %s1009 = int_to_ptr.vmem [resolvable:$true] %s1008
      %1011 = dma.vmem_to_hbm [thread:$0]  %s1009, 16, %s7, [#allocation4]
    $region37: #{tpu_custom_call.1} parent=1 // pred_fallthru
      _
    // Predicated region
    $region38: #{tpu_custom_call.1} parent=1 // pred_check
      _
    $region39: #{tpu_custom_call.1} parent=1 // pred_check_branch
      %1013 = sbr.rel (0) target = $region41
    $region40: #{tpu_custom_call.1} parent=1 // pred_region
      %1014 = dma.done [#allocation4], 16
    $region41: #{tpu_custom_call.1} parent=1 // pred_fallthru
      _
    %1015 = vsyncpa [#allocation3], 1
    %1016 = vsyncpa [#allocation4], 1

</llo_original>
